<compile_context>
chip_gen: v7x
topology: tpu7x:2x2x1
jax: 0.10.0
libtpu: 0.0.40
codegen_flags: <defaults>
</compile_context>

<pallas_src>
import jax
import jax.numpy as jnp
from jax import lax
from jax.experimental import pallas as pl
from jax.experimental.pallas import tpu as pltpu


def _proj_kernel(x_ref, w_ref, b_ref, o_ref):
    # x_ref: (TM, K) flattened patches
    # w_ref: (E, K)  projection weight (resident)
    # b_ref: (E, 1)  bias, f32 (resident)
    # o_ref: (E, TM) lane-dense output tile (already "NCHW-oriented")
    acc = lax.dot_general(
        w_ref[...], x_ref[...],
        dimension_numbers=(((1,), (1,)), ((), ())),   # contract K of both -> (E, TM)
        preferred_element_type=jnp.float32,
    )
    acc = acc + b_ref[...]                            # (E, 1) broadcast over TM
    o_ref[...] = acc.astype(o_ref.dtype)


def _choose_tile_m(np_total, k, e, in_bytes, out_bytes):
    """Pick the patch-row tile TM.

    Small problems use the full Np (block == full dim, always legal).  Large
    problems use a 128-aligned tile (256/512 typical) sized so that the
    double-buffered xp/out tiles stay within a budget that fits v7x's 64 MiB
    VMEM (and therefore v5e/v6e's 128 MiB as well).
    """
    if np_total <= 512:
        return int(np_total)
    budget = 12 << 20                                  # double-buffered tile budget
    per_row = 2 * (k * in_bytes + e * out_bytes)       # xp row + out col, x2 buffers
    tm = budget // max(per_row, 1)
    tm = max(min(tm, 512), 128)
    return int((tm // 128) * 128)


def patch_embed_2d(x, weight, bias, patch_size, *, compute_dtype=None):
    """Pallas implementation of PatchEmbed2D.forward (norm_layer=None).

    x:      (B, C, H, W)   NCHW
    weight: (E, C, ph, pw) conv weight (OIHW, PyTorch layout)
    bias:   (E,)
    compute_dtype: optional dtype (e.g. jnp.bfloat16) for the MXU operands;
                   accumulation stays f32, output dtype matches x.
    returns (B, E, Hp, Wp) NCHW
    """
    B, C, H, W = x.shape
    ph, pw = patch_size
    E = weight.shape[0]
    out_dtype = x.dtype

    # --- nn.ZeroPad2d((left, right, top, bottom)) logic ---
    pad_top = pad_bottom = pad_left = pad_right = 0
    h_rem = H % ph
    w_rem = W % pw
    if h_rem:
        h_pad = ph - h_rem
        pad_top = h_pad // 2
        pad_bottom = h_pad - pad_top
    if w_rem:
        w_pad = pw - w_rem
        pad_left = w_pad // 2
        pad_right = w_pad - pad_left
    x = jnp.pad(x, ((0, 0), (0, 0), (pad_top, pad_bottom), (pad_left, pad_right)))

    Hp = (H + pad_top + pad_bottom) // ph
    Wp = (W + pad_left + pad_right) // pw
    Np = Hp * Wp
    K = C * ph * pw

    # --- patchify glue: (B,C,Hp,ph,Wp,pw) -> (B, Np, K), K ordered (C, ph, pw) ---
    xp = (
        x.reshape(B, C, Hp, ph, Wp, pw)
        .transpose(0, 2, 4, 1, 3, 5)
        .reshape(B, Np, K)
    )
    wmat = weight.reshape(E, K)                        # no host-side transpose
    bcol = bias.astype(jnp.float32).reshape(E, 1)

    if compute_dtype is not None:
        xp = xp.astype(compute_dtype)
        wmat = wmat.astype(compute_dtype)

    in_bytes = xp.dtype.itemsize
    out_bytes = jnp.dtype(out_dtype).itemsize

    TM = _choose_tile_m(Np, K, E, in_bytes, out_bytes)
    nt = pl.cdiv(Np, TM)

    # Explicit VMEM budget: double-buffered xp/out tiles + resident weight/bias,
    # with 2x headroom, clamped to stay well under v7x's 64 MiB physical VMEM.
    tile_bytes = 2 * TM * (K * in_bytes + E * out_bytes)
    resident_bytes = 2 * (E * K * in_bytes + E * 4)
    vmem_limit = int(min(max(2 * (tile_bytes + resident_bytes), 32 << 20), 56 << 20))

    flops = 2 * B * Np * K * E
    bytes_accessed = (
        B * Np * K * in_bytes + E * K * in_bytes + E * 4 + B * E * Np * out_bytes
    )

    out = pl.pallas_call(
        _proj_kernel,
        out_shape=jax.ShapeDtypeStruct((B, E, Np), out_dtype),
        grid_spec=pltpu.PrefetchScalarGridSpec(
            num_scalar_prefetch=0,
            grid=(B, nt),
            in_specs=[
                # xp tile: one batch element, TM patch rows, full K
                pl.BlockSpec((None, TM, K), lambda b, i: (b, i, 0)),
                # resident weight / bias (constant index_map -> DMA'd once)
                pl.BlockSpec((E, K), lambda b, i: (0, 0)),
                pl.BlockSpec((E, 1), lambda b, i: (0, 0)),
            ],
            # lane-dense (E, TM) output tile, already in NCHW orientation
            out_specs=pl.BlockSpec((None, E, TM), lambda b, i: (b, 0, i)),
        ),
        compiler_params=pltpu.CompilerParams(
            dimension_semantics=("parallel", "parallel"),
            vmem_limit_bytes=vmem_limit,
        ),
        cost_estimate=pl.CostEstimate(
            flops=flops, transcendentals=0, bytes_accessed=bytes_accessed
        ),
    )(xp, wmat, bcol)

    # Free reshape: (B, E, Hp*Wp) -> (B, E, Hp, Wp); no transpose pass needed.
    return out.reshape(B, E, Hp, Wp)


def _reference(x, weight, bias, patch_size):
    """Strided-conv reference with the module's ZeroPad2d convention."""
    ph, pw = patch_size
    H, W = x.shape[2], x.shape[3]
    pt = pb = plft = prgt = 0
    if H % ph:
        h_pad = ph - H % ph
        pt = h_pad // 2
        pb = h_pad - pt
    if W % pw:
        w_pad = pw - W % pw
        plft = w_pad // 2
        prgt = w_pad - plft
    y = lax.conv_general_dilated(
        x, weight,
        window_strides=patch_size,
        padding=((pt, pb), (plft, prgt)),
        dimension_numbers=("NCHW", "OIHW", "NCHW"),
    )
    return y + bias[None, :, None, None]


if __name__ == "__main__":
    key = jax.random.PRNGKey(0)
    k1, k2, k3, k4 = jax.random.split(key, 4)

    # Config 1: divisible H/W, f32 exact path.
    B, C, E = 2, 4, 32
    img, patch = (16, 16), (4, 4)
    x = jax.random.normal(k1, (B, C, *img), dtype=jnp.float32)
    w = jax.random.normal(k2, (E, C, *patch), dtype=jnp.float32) * 0.02
    b = jax.random.normal(k3, (E,), dtype=jnp.float32) * 0.02

    y = jax.block_until_ready(patch_embed_2d(x, w, b, patch))
    y_ref = _reference(x, w, b, patch)
    assert y.shape == (B, E, img[0] // patch[0], img[1] // patch[1])
    assert jnp.allclose(y, y_ref, atol=1e-4, rtol=1e-4)

    # Config 2: non-divisible H/W exercises the ZeroPad2d path.
    x2 = jax.random.normal(k4, (1, 3, 10, 14), dtype=jnp.float32)
    w2 = jax.random.normal(k2, (E, 3, *patch), dtype=jnp.float32) * 0.02
    y2 = jax.block_until_ready(patch_embed_2d(x2, w2, b, patch))
    y2_ref = _reference(x2, w2, b, patch)
    assert y2.shape == (1, E, 3, 4)
    assert jnp.allclose(y2, y2_ref, atol=1e-4, rtol=1e-4)

    # Config 3: bf16 operands (MXU-friendly on v6e/v7x), f32 accumulation.
    y3 = jax.block_until_ready(
        patch_embed_2d(x, w, b, patch, compute_dtype=jnp.bfloat16)
    )
    assert jnp.allclose(y3, y_ref, atol=3e-2, rtol=3e-2)

    print("KERNEL_OK")
</pallas_src>

<mosaic_0001>
module attributes {stable_mosaic.version = 11 : i64} {
  func.func @_proj_kernel(%arg0: i32, %arg1: i32, %arg2: memref<1x16x64xf32, #tpu.memory_space<vmem>>, %arg3: memref<32x64xf32, #tpu.memory_space<vmem>>, %arg4: memref<32x1xf32, #tpu.memory_space<vmem>>, %arg5: memref<1x32x16xf32, #tpu.memory_space<vmem>>) attributes {dimension_semantics = [#tpu.dimension_semantics<parallel>, #tpu.dimension_semantics<parallel>], iteration_bounds = array<i64: 2, 1>, scalar_prefetch = 0 : i64, scratch_operands = 0 : i64, tpu.core_type = #tpu.core_type<tc>, window_params = [{transform_indices = @transform_0, window_bounds = array<i64: 1, 16, 64>}, {pipeline_mode = #tpu.pipeline_mode<synchronous>, transform_indices = @transform_1, window_bounds = array<i64: 32, 64>}, {pipeline_mode = #tpu.pipeline_mode<synchronous>, transform_indices = @transform_2, window_bounds = array<i64: 32, 1>}, {transform_indices = @transform_3, window_bounds = array<i64: 1, 32, 16>}]} {
    %c0 = arith.constant 0 : index
    %c0_0 = arith.constant 0 : index
    %0 = vector.load %arg3[%c0, %c0_0] : memref<32x64xf32, #tpu.memory_space<vmem>>, vector<32x64xf32>
    %c0_1 = arith.constant 0 : index
    %c0_2 = arith.constant 0 : index
    %c0_3 = arith.constant 0 : index
    %1 = vector.load %arg2[%c0_1, %c0_2, %c0_3] : memref<1x16x64xf32, #tpu.memory_space<vmem>>, vector<1x16x64xf32>
    %2 = vector.shape_cast %1 : vector<1x16x64xf32> to vector<16x64xf32>
    %cst = arith.constant dense<0.000000e+00> : vector<32x16xf32>
    %3 = tpu.matmul %0, %2, %cst {dimension_numbers = #tpu.dot_dimension_numbers<[1], [1], [0], [0], [0, 0, 1, 0], [], []>} : vector<32x64xf32>, vector<16x64xf32>, vector<32x16xf32> -> vector<32x16xf32>
    %c0_4 = arith.constant 0 : index
    %c0_5 = arith.constant 0 : index
    %4 = vector.load %arg4[%c0_4, %c0_5] : memref<32x1xf32, #tpu.memory_space<vmem>>, vector<32x1xf32>
    %5 = vector.broadcast %4 : vector<32x1xf32> to vector<32x16xf32>
    %6 = arith.addf %3, %5 : vector<32x16xf32>
    %c0_6 = arith.constant 0 : index
    %c0_7 = arith.constant 0 : index
    %c0_8 = arith.constant 0 : index
    %7 = vector.load %arg5[%c0_6, %c0_7, %c0_8] : memref<1x32x16xf32, #tpu.memory_space<vmem>>, vector<1x32x16xf32>
    %8 = vector.shape_cast %7 : vector<1x32x16xf32> to vector<32x16xf32>
    %9 = vector.shape_cast %6 : vector<32x16xf32> to vector<1x32x16xf32>
    tpu.vector_store %arg5[%c0_6, %c0_7, %c0_8], %9 {strides = array<i32>} : memref<1x32x16xf32, #tpu.memory_space<vmem>>, vector<1x32x16xf32>,
    return
  }
  func.func @transform_0(%arg0: i32, %arg1: i32) -> (i32, i32, i32) {
    %c0_i32 = arith.constant 0 : i32
    %c0_i32_0 = arith.constant 0 : i32
    return %arg0, %arg1, %c0_i32 : i32, i32, i32
  }
  func.func @transform_1(%arg0: i32, %arg1: i32) -> (i32, i32) {
    %c0_i32 = arith.constant 0 : i32
    %c0_i32_0 = arith.constant 0 : i32
    %c0_i32_1 = arith.constant 0 : i32
    return %c0_i32, %c0_i32_0 : i32, i32
  }
  func.func @transform_2(%arg0: i32, %arg1: i32) -> (i32, i32) {
    %c0_i32 = arith.constant 0 : i32
    %c0_i32_0 = arith.constant 0 : i32
    %c0_i32_1 = arith.constant 0 : i32
    return %c0_i32, %c0_i32_0 : i32, i32
  }
  func.func @transform_3(%arg0: i32, %arg1: i32) -> (i32, i32, i32) {
    %c0_i32 = arith.constant 0 : i32
    %c0_i32_0 = arith.constant 0 : i32
    return %arg0, %c0_i32, %arg1 : i32, i32, i32
  }
}

</mosaic_0001>

<llo_original>
// kernel: tpu_custom_call.1
$region0: #{tpu_custom_call.1}
  #allocation0 [shape = 'u32[]', space=smem, size = 0x4, offset = 0x4, fixed_abs, tag = 'smem constant byte address 0x4 - core index']
  #allocation1 [shape = 'u32[144,128]{1,0:T(1,128)}', space=vmem, size = 0x12000, scoped, tag = 'internal scratch']
  %s0 = inlined_call_operand.vmem [shape: f32[2,16,64], index: 0, kind: input, shape index: {}]
  %s1 = inlined_call_operand.hbm [shape: f32[32,64], index: 1, kind: input, shape index: {}]
  %s2 = inlined_call_operand.vmem [shape: f32[32,1], index: 2, kind: input, shape index: {}]
  %s3 = inlined_call_operand.vmem [shape: f32[2,32,16], index: 3, kind: output, shape index: {}]
  %s4 = sld [smem:[#allocation0]]
  $region49: #{tpu_custom_call.1} parent=0
    _
  %s6 = ssub.s32 1, %s4
  %s7 = scalar_select 0, %s6, %s4
  $region1: #{tpu_custom_call.1} parent=0
    #allocation2 [shape = 'u8[16384]{0}', space=vmem, size = 0x4000, scoped, tag = 'input window, operand 1, single buffered']
    #allocation3 [shape = 's32[2]{0}', space=sflag, size = 0x8, scoped, tag = 'scoped memory for tpu_custom_call.1']
    %8 = vsyncpa [#allocation3], 0
    loop: start=0, step=1, limit=4
    $region2: #{tpu_custom_call.1} parent=1 // loop_pre_header
      _
    $region3: #{tpu_custom_call.1} parent=1 // loop_header
      %s10 = sphi 0, %s14
      %p11 = scmp.ge.s32.totalorder %s10, 4
      %s17 = sphi 0, %s29
      %s18 = sphi 0, %s25
      %s19 = sphi 0, %s17
      %s20 = sphi 0, %s18
      %s21 = sphi 0, %s19
      %s22 = sphi 0, %s20
      %s34 = sphi 0, %s36
      %s37 = sphi 0, %s34
      %s38 = sphi 0, %s37
      %s54 = sphi 0, %s38
      %s58 = sphi 0, %s58
      %s60 = sphi 0, %s58
      %s61 = sphi 0, %s60
      %s75 = sphi 0, %s61
      %s79 = sphi 0, %s79
      %s81 = sphi 0, %s79
      %s82 = sphi 0, %s81
      %s96 = sphi 0, %s82
      %s104 = sphi 0, %s106
      %s107 = sphi 0, %s104
      %s108 = sphi 0, %s107
      %s124 = sphi 0, %s108
    $region4: #{tpu_custom_call.1} parent=1 // loop_header_branch
      %13 = sbr.rel (%p11) target = $region8
    $region5: #{tpu_custom_call.1} parent=1 // loop_body
      %s15 = ssub.s32 %s10, 1
      %s16 = ssub.s32 %s10, 2
      %s23 = sadd.s32 1, %s18
      %p24 = scmp.ge.s32.totalorder %s23, 1
      %s25 = scalar_select %p24, 0, %s23
      %s26 = sadd.s32 1, %s17
      %s27 = scalar_select %p24, %s26, %s17
      %p28 = scmp.ge.s32.totalorder %s27, 2
      %s29 = scalar_select %p28, 0, %s27
      %s30 = ssub.s32 %s17, %s29
      %s31 = ssub.s32 %s18, %s25
      %s32 = sor.u32 %s30, %s31
      %p33 = scmp.eq.s32.totalorder %s32, 0
      %s35 = sadd.s32 %s34, 1
      %s36 = scalar_select %p33, %s34, %s35
      %p39 = pneg %p33
      %p40 = scmp.eq.s32.totalorder %s10, 1
      %p41 = por %p39, %p40
      %p42 = scmp.ne.s32.totalorder %s34, %s37
      %p43 = scmp.eq.s32.totalorder %s10, 0
      %p44 = por %p42, %p43
      %p45 = scmp.ne.s32.totalorder %s34, %s37
      %p46 = scmp.eq.s32.totalorder %s15, 1
      %p47 = por %p45, %p46
      %p48 = scmp.ne.s32.totalorder %s37, %s38
      %p49 = scmp.eq.s32.totalorder %s15, 0
      %p50 = por %p48, %p49
      %p51 = scmp.ne.s32.totalorder %s37, %s38
      %p52 = scmp.eq.s32.totalorder %s16, 1
      %p53 = por %p51, %p52
      %p55 = scmp.ne.s32.totalorder %s38, %s54
      %p56 = scmp.eq.s32.totalorder %s16, 0
      %p57 = por %p55, %p56
      %s59 = sadd.s32 %s58, 1
      %p62 = scmp.eq.s32.totalorder %s10, 1
      %p63 = scmp.ne.s32.totalorder %s58, %s60
      %p64 = scmp.eq.s32.totalorder %s10, 0
      %p65 = por %p63, %p64
      %p66 = scmp.ne.s32.totalorder %s58, %s60
      %p67 = scmp.eq.s32.totalorder %s15, 1
      %p68 = por %p66, %p67
      %p69 = scmp.ne.s32.totalorder %s60, %s61
      %p70 = scmp.eq.s32.totalorder %s15, 0
      %p71 = por %p69, %p70
      %p72 = scmp.ne.s32.totalorder %s60, %s61
      %p73 = scmp.eq.s32.totalorder %s16, 1
      %p74 = por %p72, %p73
      %p76 = scmp.ne.s32.totalorder %s61, %s75
      %p77 = scmp.eq.s32.totalorder %s16, 0
      %p78 = por %p76, %p77
      %s80 = sadd.s32 %s79, 1
      %p83 = scmp.eq.s32.totalorder %s10, 1
      %p84 = scmp.ne.s32.totalorder %s79, %s81
      %p85 = scmp.eq.s32.totalorder %s10, 0
      %p86 = por %p84, %p85
      %p87 = scmp.ne.s32.totalorder %s79, %s81
      %p88 = scmp.eq.s32.totalorder %s15, 1
      %p89 = por %p87, %p88
      %p90 = scmp.ne.s32.totalorder %s81, %s82
      %p91 = scmp.eq.s32.totalorder %s15, 0
      %p92 = por %p90, %p91
      %p93 = scmp.ne.s32.totalorder %s81, %s82
      %p94 = scmp.eq.s32.totalorder %s16, 1
      %p95 = por %p93, %p94
      %p97 = scmp.ne.s32.totalorder %s82, %s96
      %p98 = scmp.eq.s32.totalorder %s16, 0
      %p99 = por %p97, %p98
      %s100 = ssub.s32 %s17, %s29
      %s101 = ssub.s32 %s18, %s25
      %s102 = sor.u32 %s100, %s101
      %p103 = scmp.eq.s32.totalorder %s102, 0
      %s105 = sadd.s32 %s104, 1
      %s106 = scalar_select %p103, %s104, %s105
      %p109 = pneg %p103
      %p110 = scmp.eq.s32.totalorder %s10, 1
      %p111 = por %p109, %p110
      %p112 = scmp.ne.s32.totalorder %s104, %s107
      %p113 = scmp.eq.s32.totalorder %s10, 0
      %p114 = por %p112, %p113
      %p115 = scmp.ne.s32.totalorder %s104, %s107
      %p116 = scmp.eq.s32.totalorder %s15, 1
      %p117 = por %p115, %p116
      %p118 = scmp.ne.s32.totalorder %s107, %s108
      %p119 = scmp.eq.s32.totalorder %s15, 0
      %p120 = por %p118, %p119
      %p121 = scmp.ne.s32.totalorder %s107, %s108
      %p122 = scmp.eq.s32.totalorder %s16, 1
      %p123 = por %p121, %p122
      %p125 = scmp.ne.s32.totalorder %s108, %s124
      %p126 = scmp.eq.s32.totalorder %s16, 0
      %p127 = por %p125, %p126
      %p128 = scmp.le.s32.totalorder 1, %s10
      %p129 = scmp.lt.s32.totalorder %s10, 3
      %p130 = pnand %p128, %p129
      %p131 = pneg %p130
      // Predicated region
      $region9: #{tpu_custom_call.1} parent=5 // pred_check
        _
      $region10: #{tpu_custom_call.1} parent=5 // pred_check_branch
        %133 = sbr.rel (%p130) target = $region12
      $region11: #{tpu_custom_call.1} parent=5 // pred_region
        %s134 = ssub.s32 %s10, 1
        // Predicated region
        $region13: #{tpu_custom_call.1} parent=11 // pred_check
          %p135 = pneg %p71
        $region14: #{tpu_custom_call.1} parent=11 // pred_check_branch
          %137 = sbr.rel (%p135) target = $region16
        $region15: #{tpu_custom_call.1} parent=11 // pred_region
          %s139 = ssub.s32 512, 512
          %140 = vsyncadd [#allocation3], %s139
          %s141 = sshll.u32 [#allocation2], 4
          %s142 = int_to_ptr.vmem [resolvable:$true] %s141
          %147 = dma.hbm_to_vmem [thread:$0]  %s1, 512, %s142, [#allocation3], 128, 128, 8
        $region16: #{tpu_custom_call.1} parent=11 // pred_fallthru
          _
        // Predicated region
        $region17: #{tpu_custom_call.1} parent=11 // pred_check
          %p148 = pneg %p92
        $region18: #{tpu_custom_call.1} parent=11 // pred_check_branch
          %150 = sbr.rel (%p148) target = $region20
        $region19: #{tpu_custom_call.1} parent=11 // pred_region
          _
        $region20: #{tpu_custom_call.1} parent=11 // pred_fallthru
          _
      $region12: #{tpu_custom_call.1} parent=5 // pred_fallthru
        _
      %p151 = scmp.lt.s32.totalorder %s10, 2
      // Predicated region
      $region21: #{tpu_custom_call.1} parent=5 // pred_check
        %p152 = pneg %p151
      $region22: #{tpu_custom_call.1} parent=5 // pred_check_branch
        %154 = sbr.rel (%p152) target = $region24
      $region23: #{tpu_custom_call.1} parent=5 // pred_region
        // Predicated region
        $region25: #{tpu_custom_call.1} parent=23 // pred_check
          %p155 = pneg %p44
        $region26: #{tpu_custom_call.1} parent=23 // pred_check_branch
          %157 = sbr.rel (%p155) target = $region28
        $region27: #{tpu_custom_call.1} parent=23 // pred_region
          %s158 = smul.u32 2, %s18
          %p159 = scmp.lt.s32.totalorder %s17, 1
          %s160 = scalar_select %p159, %s17, 1
          %p161 = scmp.lt.s32.totalorder %s158, 1
          %s162 = scalar_select %p161, %s158, 1
          %s163 = smul.addr %s160, 2
          %s164 = sadd.s32 %s162, %s163
          %s165 = smul.addr %s164, 8
          %s166 = scalar_lea.vmem %s0, %s165
          %s167 = smul.u32 2, %s18
        $region28: #{tpu_custom_call.1} parent=23 // pred_fallthru
          _
      $region24: #{tpu_custom_call.1} parent=5 // pred_fallthru
        _
      %p168 = scmp.le.s32.totalorder 1, %s10
      %p169 = scmp.lt.s32.totalorder %s10, 3
      %p170 = pnand %p168, %p169
      %p171 = pneg %p170
      // Predicated region
      $region29: #{tpu_custom_call.1} parent=5 // pred_check
        _
      $region30: #{tpu_custom_call.1} parent=5 // pred_check_branch
        %173 = sbr.rel (%p170) target = $region32
      $region31: #{tpu_custom_call.1} parent=5 // pred_region
        %s174 = ssub.s32 %s10, 1
        // Predicated region
        $region33: #{tpu_custom_call.1} parent=31 // pred_check
          %p175 = pneg %p71
        $region34: #{tpu_custom_call.1} parent=31 // pred_check_branch
          %177 = sbr.rel (%p175) target = $region36
        $region35: #{tpu_custom_call.1} parent=31 // pred_region
          %178 = dma.done [#allocation3], 512
        $region36: #{tpu_custom_call.1} parent=31 // pred_fallthru
          _
        %s179 = smul.u32 2, %s20
        %p180 = scmp.lt.s32.totalorder %s19, 1
        %s181 = scalar_select %p180, %s19, 1
        %p182 = scmp.lt.s32.totalorder %s179, 1
        %s183 = scalar_select %p182, %s179, 1
        %s184 = smul.addr %s181, 2
        %s185 = sadd.s32 %s183, %s184
        %s186 = smul.addr %s185, 8
        %s187 = scalar_lea.vmem %s0, %s186
        %p188 = pneg %p50
        %p189 = pneg %p47
        %p190 = pneg %p71
        %p191 = pneg %p68
        %p192 = pneg %p92
        %p193 = pneg %p89
        %p194 = pneg %p120
        %p195 = pneg %p117
        %p196 = scmp.lt.s32.totalorder %s19, 1
        %s197 = scalar_select %p196, %s19, 1
        %p198 = scmp.lt.s32.totalorder %s20, 0
        %s199 = scalar_select %p198, %s20, 0
        %s200 = smul.addr %s197, 4
        %s201 = sadd.s32 %s199, %s200
        %s202 = smul.addr %s201, 8
        %s203 = scalar_lea.vmem %s3, %s202
        %s204 = smul.u32 2, %s20
        %p205 = scmp.lt.s32.totalorder %s19, 1
        %s206 = scalar_select %p205, %s19, 1
        %p207 = scmp.lt.s32.totalorder %s204, 1
        %s208 = scalar_select %p207, %s204, 1
        %s209 = smul.addr %s206, 2
        %s210 = sadd.s32 %s208, %s209
        %s211 = smul.addr %s210, 8
        %s212 = scalar_lea.vmem %s0, %s211
        %s213 = smul.u32 2, %s20
        %p214 = scmp.lt.s32.totalorder %s19, 1
        %s215 = scalar_select %p214, %s19, 1
        %p216 = scmp.lt.s32.totalorder %s20, 0
        %s217 = scalar_select %p216, %s20, 0
        %s218 = smul.addr %s215, 4
        %s219 = sadd.s32 %s217, %s218
        %s220 = smul.addr %s219, 8
        %s221 = scalar_lea.vmem %s3, %s220
        %v222 = vld [vmem:[#allocation2] sm:$0xff]
        %v223 = vld [vmem:[#allocation2 + $0x8] sm:$0xff]
        %v224 = vld [vmem:[#allocation2 + $0x10] sm:$0xff]
        %v225 = vld [vmem:[#allocation2 + $0x18] sm:$0xff]
        %v226 = vld [vmem:[%s212] sm:$0xff]
        %v227 = vld [vmem:[%s212 + $0x8] sm:$0xff]
        %v228 = vld [vmem:[%s2] sm:$0xff]
        %v229 = vld [vmem:[%s2 + $0x8] sm:$0xff]
        %v230 = vld [vmem:[%s2 + $0x10] sm:$0xff]
        %v231 = vld [vmem:[%s2 + $0x18] sm:$0xff]
        %233 = vset.pattern.permute.xlu0 0
        %234 = vperm.xlu0 %233, %v228
        %v235 = vpop.permute.xlu0 %234
        %238 = vset.pattern.permute.xlu0 0
        %239 = vperm.xlu0 %238, %v229
        %v240 = vpop.permute.xlu0 %239
        %243 = vset.pattern.permute.xlu0 0
        %244 = vperm.xlu0 %243, %v230
        %v245 = vpop.permute.xlu0 %244
        %248 = vset.pattern.permute.xlu0 0
        %249 = vperm.xlu0 %248, %v231
        %v250 = vpop.permute.xlu0 %249
        %vm252 = vcmask 523264
        %v254 = vsel %vm252, %v222, 0
        %v257 = vsel %vm252, %v223, 0
        %v260 = vsel %vm252, %v224, 0
        %v263 = vsel %vm252, %v225, 0
        %v266 = vsel %vm252, %v226, 0
        %v269 = vsel %vm252, %v227, 0
        %271 = vmatprep.subr.mxu0 0.0
        %272 = vmatpush1.xpose.msra.mxu0 %v266
        %273 = vmatprep.subr.mxu0 0.0
        %274 = vmatpush1.xpose.msra.mxu0 %v269
        %275 = vmatprep.subr.mxu0 0.0
        %276 = vmatpush1.xpose.msra.mxu0 0.0
        %277 = vmatprep.subr.mxu0 0.0
        %278 = vmatpush1.xpose.msra.mxu0 0.0
        %279 = vmatprep.subr.mxu0 0.0
        %280 = vmatpush1.xpose.msra.mxu0 0.0
        %281 = vmatprep.subr.mxu0 0.0
        %282 = vmatpush1.xpose.msra.mxu0 0.0
        %283 = vmatprep.subr.mxu0 0.0
        %284 = vmatpush1.xpose.msra.mxu0 0.0
        %285 = vmatprep.subr.mxu0 0.0
        %286 = vmatpush1.xpose.msra.mxu0 0.0
        %287 = vmatprep.subr.mxu0 0.0
        %288 = vmatpush1.xpose.msra.mxu0 0.0
        %289 = vmatprep.subr.mxu0 0.0
        %290 = vmatpush1.xpose.msra.mxu0 0.0
        %291 = vmatprep.subr.mxu0 0.0
        %292 = vmatpush1.xpose.msra.mxu0 0.0
        %293 = vmatprep.subr.mxu0 0.0
        %294 = vmatpush1.xpose.msra.mxu0 0.0
        %295 = vmatprep.subr.mxu0 0.0
        %296 = vmatpush1.xpose.msra.mxu0 0.0
        %297 = vmatprep.subr.mxu0 0.0
        %298 = vmatpush1.xpose.msra.mxu0 0.0
        %299 = vmatprep.subr.mxu0 0.0
        %300 = vmatpush1.xpose.msra.mxu0 0.0
        %301 = vmatprep.subr.mxu0 0.0
        %302 = vmatpush1.xpose.msra.mxu0 0.0
        %303 = vmatprep.subr.mxu0 0.0
        %304 = vmatpush1.xpose.msra.mxu0 0.0
        %305 = vmatprep.subr.mxu0 0.0
        %306 = vmatpush1.xpose.msra.mxu0 0.0
        %307 = vmatprep.subr.mxu0 0.0
        %308 = vmatpush1.xpose.msra.mxu0 0.0
        %309 = vmatprep.subr.mxu0 0.0
        %310 = vmatpush1.xpose.msra.mxu0 0.0
        %311 = vmatprep.subr.mxu0 0.0
        %312 = vmatpush1.xpose.msra.mxu0 0.0
        %313 = vmatprep.subr.mxu0 0.0
        %314 = vmatpush1.xpose.msra.mxu0 0.0
        %315 = vmatprep.subr.mxu0 0.0
        %316 = vmatpush1.xpose.msra.mxu0 0.0
        %317 = vmatprep.subr.mxu0 0.0
        %318 = vmatpush1.xpose.msra.mxu0 0.0
        %319 = vmatprep.subr.mxu0 0.0
        %320 = vmatpush1.xpose.msra.mxu0 0.0
        %321 = vmatprep.subr.mxu0 0.0
        %322 = vmatpush1.xpose.msra.mxu0 0.0
        %323 = vmatprep.subr.mxu0 0.0
        %324 = vmatpush1.xpose.msra.mxu0 0.0
        %325 = vmatprep.subr.mxu0 0.0
        %326 = vmatpush1.xpose.msra.mxu0 0.0
        %327 = vmatprep.subr.mxu0 0.0
        %328 = vmatpush1.xpose.msra.mxu0 0.0
        %329 = vmatprep.subr.mxu0 0.0
        %330 = vmatpush1.xpose.msra.mxu0 0.0
        %331 = vmatprep.subr.mxu0 0.0
        %332 = vmatpush1.xpose.msra.mxu0 0.0
        %333 = vmatprep.subr.mxu0 0.0
        %334 = vmatpush1.xpose.msra.mxu0 0.0
        %335 = vmatprep.mubr.f32.mxu0 0.0
        %336 = vmatmul.mubr.f32.gmra.mrb[0].mxu0 %v254
        %v337 = vpop.f32.mrb[0].mxu0
        %v338 = vadd.f32 %v235, %v337
        %v339 = vpop.f32.mrb[0].mxu0
        %340 = vmatprep.mubr.f32.mxu0 0.0
        %341 = vmatmul.mubr.f32.gmra.mrb[0].mxu0 %v257
        %v342 = vpop.f32.mrb[0].mxu0
        %v343 = vadd.f32 %v240, %v342
        %v344 = vpop.f32.mrb[0].mxu0
        %345 = vmatprep.mubr.f32.mxu0 0.0
        %346 = vmatmul.mubr.f32.gmra.mrb[0].mxu0 %v260
        %v347 = vpop.f32.mrb[0].mxu0
        %v348 = vadd.f32 %v245, %v347
        %v349 = vpop.f32.mrb[0].mxu0
        %350 = vmatprep.mubr.f32.mxu0 0.0
        %351 = vmatmul.mubr.f32.gmra.mrb[0].mxu0 %v263
        %v352 = vpop.f32.mrb[0].mxu0
        %v353 = vadd.f32 %v250, %v352
        %v354 = vpop.f32.mrb[0].mxu0
        %355 = vdwg.mxu0
        %vm356 = vcmask 130048
        %357 = vst.msk [vmem:[%s221] sm:$0xff] %vm356, %v338
        %358 = vst.msk [vmem:[%s221 + $0x8] sm:$0xff] %vm356, %v343
        %359 = vst.msk [vmem:[%s221 + $0x10] sm:$0xff] %vm356, %v348
        %360 = vst.msk [vmem:[%s221 + $0x18] sm:$0xff] %vm356, %v353
        %p361 = scmp.lt.s32.totalorder %s19, 1
        %s362 = scalar_select %p361, %s19, 1
        %p363 = scmp.lt.s32.totalorder %s20, 0
        %s364 = scalar_select %p363, %s20, 0
        %s365 = smul.addr %s362, 4
        %s366 = sadd.s32 %s364, %s365
        %s367 = smul.addr %s366, 8
        %s368 = scalar_lea.vmem %s3, %s367
        // Predicated region
        $region37: #{tpu_custom_call.1} parent=31 // pred_check
          %p369 = pneg %p117
        $region38: #{tpu_custom_call.1} parent=31 // pred_check_branch
          %371 = sbr.rel (%p369) target = $region40
        $region39: #{tpu_custom_call.1} parent=31 // pred_region
          _
        $region40: #{tpu_custom_call.1} parent=31 // pred_fallthru
          _
      $region32: #{tpu_custom_call.1} parent=5 // pred_fallthru
        _
      %p372 = scmp.le.s32.totalorder 2, %s10
      // Predicated region
      $region41: #{tpu_custom_call.1} parent=5 // pred_check
        %p373 = pneg %p372
      $region42: #{tpu_custom_call.1} parent=5 // pred_check_branch
        %375 = sbr.rel (%p373) target = $region44
      $region43: #{tpu_custom_call.1} parent=5 // pred_region
        %s376 = ssub.s32 %s10, 2
        // Predicated region
        $region45: #{tpu_custom_call.1} parent=43 // pred_check
          %p377 = pneg %p123
        $region46: #{tpu_custom_call.1} parent=43 // pred_check_branch
          %379 = sbr.rel (%p377) target = $region48
        $region47: #{tpu_custom_call.1} parent=43 // pred_region
          %p380 = scmp.lt.s32.totalorder %s21, 1
          %s381 = scalar_select %p380, %s21, 1
          %p382 = scmp.lt.s32.totalorder %s22, 0
          %s383 = scalar_select %p382, %s22, 0
          %s384 = smul.addr %s381, 4
          %s385 = sadd.s32 %s383, %s384
          %s386 = smul.addr %s385, 8
          %s387 = scalar_lea.vmem %s3, %s386
        $region48: #{tpu_custom_call.1} parent=43 // pred_fallthru
          _
      $region44: #{tpu_custom_call.1} parent=5 // pred_fallthru
        _
    $region6: #{tpu_custom_call.1} parent=1 // loop_footer
      %s14 = sadd.s32 1, %s10
    $region7: #{tpu_custom_call.1} parent=1 // loop_footer_branch
      %9 = sbr.rel target = $region3
    $region8: #{tpu_custom_call.1} parent=1 // loop_exit
      _
    %388 = vsyncpa [#allocation3], 1
    %s389 = scalar_lea.sflag [#allocation3], 1
    %390 = vsyncpa %s389, 1

</llo_original>
